<compile_context>
chip_gen: v7x
topology: tpu7x:2x2x1
jax: 0.10.0
libtpu: 0.0.40
codegen_flags: <defaults>
</compile_context>

<pallas_src>
import jax
import jax.numpy as jnp
from jax.experimental import pallas as pl
from jax.experimental.pallas import tpu as pltpu


# ----------------------------- fused kernel ---------------------------------

def lenet5_kernel(x_ref, w1_ref, b1_ref, w2_ref, b2_ref,
                  wf1_ref, bf1_ref, sel_ref, wf2_ref, bf2_ref, o_ref):
    f32, bf16 = jnp.float32, jnp.bfloat16
    R = x_ref.shape[0]                       # TB * 20 (20-row pitch per sample)

    # ---- conv1 (16->6, k=3, pad=2): one wide matmul, then shift-add ky groups
    # x block: (R, 256) bf16, lanes = w_in*16 + cin; rows 0,1,18,19 of each
    # sample are zero H-pad rows, so the flat sublane shifts never mix samples.
    y1 = jnp.dot(x_ref[...], w1_ref[...], preferred_element_type=f32)    # (R,384)
    c1 = (y1[0:R - 2, 0:108] + y1[1:R - 1, 128:236] + y1[2:R, 256:364])
    c1 = jnp.maximum(c1 + b1_ref[...], 0.0)                              # (R-2,108)

    # ---- pool1 (2x2): lane-pair max (shift 6) + sublane-pair max (shift 1) --
    # odd pooled columns / rows are never compacted - downstream weights have
    # zero rows there and downstream row indexing only touches valid rows.
    cm1 = jnp.maximum(c1[:, 0:102], c1[:, 6:108])                        # (R-2,102)
    rm1 = jnp.maximum(cm1[0:R - 3, :], cm1[1:R - 2, :]).astype(bf16)     # (R-3,102)

    # ---- conv2 (6->16, k=3): one matmul + shift-add (row stride 2 after pool1)
    y2 = jnp.dot(rm1, w2_ref[...], preferred_element_type=f32)           # (R-3,384)
    c2 = (y2[0:R - 7, 0:112] + y2[2:R - 5, 128:240] + y2[4:R - 3, 256:368])
    c2 = jnp.maximum(c2 + b2_ref[...], 0.0)                              # (R-7,112)

    # ---- pool2 (2x2, floor): lane shift 16, sublane shift 2 -----------------
    cm2 = jnp.maximum(c2[:, 0:96], c2[:, 16:112])                        # (R-7,96)
    rm2 = jnp.maximum(cm2[0:R - 9, :], cm2[2:R - 7, :]).astype(bf16)     # (R-9,96)

    # ---- fc1 (144->120) as a banded matmul over the 3 pooled rows (stride 4)
    z = jnp.dot(rm2, wf1_ref[...], preferred_element_type=f32)           # (R-9,384)
    h = (z[0:R - 17, 0:120] + z[4:R - 13, 128:248] + z[8:R - 9, 256:376])
    h = jnp.maximum(h + bf1_ref[...], 0.0).astype(bf16)                  # (R-17,120)

    # ---- gather the one valid row per sample (row s*20) via one-hot matmul --
    hs = jnp.dot(sel_ref[:, 0:R - 17], h, preferred_element_type=f32)    # (TB,120)

    # ---- fc2 (120->84) + final ReLU (as in the reference), lane-dense store -
    y = jnp.dot(hs.astype(bf16), wf2_ref[...],
                preferred_element_type=f32) + bf2_ref[...]
    o_ref[...] = jnp.maximum(y, 0.0)                                     # (TB,128)


# ----------------------------- host-side weight prep ------------------------

def _conv1_band_weights(w1):
    """(6,16,3,3) OIHW -> (256, 384): ky band at lanes [ky*128, ky*128+108).

    Row = w_in*16 + cin (w_in 0..15, unpadded), col within band = wo*6 + co.
    Width padding (pad=2) is folded in via eye(16, 18, k=2-kx)."""
    out = jnp.zeros((256, 384), jnp.float32)
    for ky in range(3):
        m = jnp.zeros((256, 108), jnp.float32)
        for kx in range(3):
            shift = jnp.eye(16, 18, k=2 - kx, dtype=jnp.float32)  # w_in = wo+kx-2
            m = m + jnp.kron(shift, w1[:, :, ky, kx].T)           # tap (16,6)
        out = out.at[:, ky * 128:ky * 128 + 108].set(m)
    return out.astype(jnp.bfloat16)


def _conv2_band_weights(w2):
    """(16,6,3,3) OIHW -> (102, 384): ky band at lanes [ky*128, ky*128+112).

    Row = 12*pooled_col + q (q<6 real channel, q>=6 pool1 junk lanes -> zero)."""
    out = jnp.zeros((102, 384), jnp.float32)
    for ky in range(3):
        m = jnp.zeros((108, 112), jnp.float32)
        for kx in range(3):
            shift = jnp.eye(9, 7, k=-kx, dtype=jnp.float32)       # j = w2+kx
            blk = jnp.concatenate([w2[:, :, ky, kx].T,
                                   jnp.zeros((6, 16), jnp.float32)], axis=0)
            m = m + jnp.kron(shift, blk)                          # (108, 112)
        out = out.at[:, ky * 128:ky * 128 + 112].set(m[:102])
    return out.astype(jnp.bfloat16)


def _fc1_band_weights(fc1_w):
    """(120,144) -> (96, 384): group g (pooled row ho=g) at lanes [g*128, +120).

    Input row = 16*w2 + c (pool2 layout); valid only at even w2 (=2*wo); the
    NCHW flatten order c*9 + ho*3 + wo is folded into the scatter."""
    out = jnp.zeros((96, 384), jnp.float32)
    fw = fc1_w.T                                                   # (144, 120)
    for g in range(3):
        lanes, feats = [], []
        for wo in range(3):
            for c in range(16):
                lanes.append(32 * wo + c)
                feats.append(c * 9 + g * 3 + wo)
        blk = jnp.zeros((96, 120), jnp.float32).at[jnp.array(lanes)].set(
            fw[jnp.array(feats)])
        out = out.at[:, g * 128:g * 128 + 120].set(blk)
    return out.astype(jnp.bfloat16)


def prepare_params(raw):
    wf2 = jnp.zeros((120, 128), jnp.float32).at[:, :84].set(raw["fc2_w"].T)
    bf2 = jnp.zeros((1, 128), jnp.float32).at[0, :84].set(raw["fc2_b"])
    return {
        "w1": _conv1_band_weights(raw["conv1_w"]),
        "b1": jnp.tile(raw["conv1_b"], 18).reshape(1, 108).astype(jnp.float32),
        "w2": _conv2_band_weights(raw["conv2_w"]),
        "b2": jnp.tile(raw["conv2_b"], 7).reshape(1, 112).astype(jnp.float32),
        "wf1": _fc1_band_weights(raw["fc1_w"]),
        "bf1": raw["fc1_b"].reshape(1, 120).astype(jnp.float32),
        "wf2": wf2.astype(jnp.bfloat16),
        "bf2": bf2,
    }


# ----------------------------- forward wrapper ------------------------------

def lenet5_forward(x, p, tb=32):
    """x: (B, 16, 1, 16, 16) float32, as in the PyTorch module."""
    B = x.shape[0]
    assert x.shape[1:] == (16, 1, 16, 16), x.shape

    if B < tb:                       # small batches: one tile, even pitch count
        tb = B if B % 2 == 0 else B + 1
    Bp = ((B + tb - 1) // tb) * tb   # pad batch to a multiple of the tile

    xs = jnp.squeeze(x, axis=2)                          # (B,16,16,16) NCHW
    xs = jnp.transpose(xs, (0, 2, 3, 1)).astype(jnp.bfloat16)   # NHWC bf16
    xs = jnp.pad(xs, ((0, Bp - B), (2, 2), (0, 0), (0, 0)))     # H pad only
    x2d = xs.reshape(Bp * 20, 256)                       # rows = s*20 + hp

    # one-hot row selector: sample s's fc1 output lives at flat row s*20
    sel = jnp.zeros((tb, tb * 20), jnp.float32)
    sel = sel.at[jnp.arange(tb), jnp.arange(tb) * 20].set(1.0).astype(jnp.bfloat16)

    def _const(a):
        return pl.BlockSpec(a.shape, lambda i, _n=a.ndim: (0,) * _n)

    grid_spec = pltpu.PrefetchScalarGridSpec(
        num_scalar_prefetch=0,
        grid=(Bp // tb,),
        in_specs=[
            pl.BlockSpec((tb * 20, 256), lambda i: (i, 0)),
            _const(p["w1"]), _const(p["b1"]),
            _const(p["w2"]), _const(p["b2"]),
            _const(p["wf1"]), _const(p["bf1"]),
            _const(sel),
            _const(p["wf2"]), _const(p["bf2"]),
        ],
        out_specs=pl.BlockSpec((tb, 128), lambda i: (i, 0)),
    )

    out = pl.pallas_call(
        lenet5_kernel,
        out_shape=jax.ShapeDtypeStruct((Bp, 128), jnp.float32),
        grid_spec=grid_spec,
        compiler_params=pltpu.CompilerParams(
            dimension_semantics=("parallel",)),
    )(x2d, p["w1"], p["b1"], p["w2"], p["b2"],
      p["wf1"], p["bf1"], sel, p["wf2"], p["bf2"])
    return out[:B, :84]


# ----------------------------- parameter init -------------------------------

def _uniform(key, shape, fan_in):
    bound = 1.0 / jnp.sqrt(float(fan_in))
    return jax.random.uniform(key, shape, jnp.float32, -bound, bound)


def init_raw_params(key):
    ks = jax.random.split(key, 8)
    return {
        "conv1_w": _uniform(ks[0], (6, 16, 3, 3), 16 * 9),   # PyTorch OIHW
        "conv1_b": _uniform(ks[1], (6,), 16 * 9),
        "conv2_w": _uniform(ks[2], (16, 6, 3, 3), 6 * 9),
        "conv2_b": _uniform(ks[3], (16,), 6 * 9),
        # TODO(synk): PyTorch re-creates fc1 at runtime from the flatten size;
        # fixed here to in_features=144 (the 16x16-input case).
        "fc1_w": _uniform(ks[4], (120, 144), 144),
        "fc1_b": _uniform(ks[5], (120,), 144),
        "fc2_w": _uniform(ks[6], (84, 120), 120),
        "fc2_b": _uniform(ks[7], (84,), 120),
    }


# ----------------------------- main ------------------------------------------

if __name__ == "__main__":
    x = jax.random.normal(jax.random.PRNGKey(0), (2, 16, 1, 16, 16),
                          dtype=jnp.float32)
    params = prepare_params(init_raw_params(jax.random.PRNGKey(1)))

    fwd = jax.jit(lambda inp: lenet5_forward(inp, params))
    out = jax.block_until_ready(fwd(x))

    assert out.shape == (2, 84), out.shape
    assert out.dtype == jnp.float32
    print("KERNEL_OK")
</pallas_src>

<mosaic_0001>
module attributes {stable_mosaic.version = 11 : i64} {
  func.func @lenet5_kernel(%arg0: i32, %arg1: memref<40x256xbf16, #tpu.memory_space<vmem>>, %arg2: memref<256x384xbf16, #tpu.memory_space<vmem>>, %arg3: memref<1x108xf32, #tpu.memory_space<vmem>>, %arg4: memref<102x384xbf16, #tpu.memory_space<vmem>>, %arg5: memref<1x112xf32, #tpu.memory_space<vmem>>, %arg6: memref<96x384xbf16, #tpu.memory_space<vmem>>, %arg7: memref<1x120xf32, #tpu.memory_space<vmem>>, %arg8: memref<2x40xbf16, #tpu.memory_space<vmem>>, %arg9: memref<120x128xbf16, #tpu.memory_space<vmem>>, %arg10: memref<1x128xf32, #tpu.memory_space<vmem>>, %arg11: memref<2x128xf32, #tpu.memory_space<vmem>>) attributes {dimension_semantics = [#tpu.dimension_semantics<parallel>], iteration_bounds = array<i64: 1>, scalar_prefetch = 0 : i64, scratch_operands = 0 : i64, tpu.core_type = #tpu.core_type<tc>, window_params = [{transform_indices = @transform_0, window_bounds = array<i64: 40, 256>}, {pipeline_mode = #tpu.pipeline_mode<synchronous>, transform_indices = @transform_1, window_bounds = array<i64: 256, 384>}, {pipeline_mode = #tpu.pipeline_mode<synchronous>, transform_indices = @transform_2, window_bounds = array<i64: 1, 108>}, {pipeline_mode = #tpu.pipeline_mode<synchronous>, transform_indices = @transform_3, window_bounds = array<i64: 102, 384>}, {pipeline_mode = #tpu.pipeline_mode<synchronous>, transform_indices = @transform_4, window_bounds = array<i64: 1, 112>}, {pipeline_mode = #tpu.pipeline_mode<synchronous>, transform_indices = @transform_5, window_bounds = array<i64: 96, 384>}, {pipeline_mode = #tpu.pipeline_mode<synchronous>, transform_indices = @transform_6, window_bounds = array<i64: 1, 120>}, {pipeline_mode = #tpu.pipeline_mode<synchronous>, transform_indices = @transform_7, window_bounds = array<i64: 2, 40>}, {pipeline_mode = #tpu.pipeline_mode<synchronous>, transform_indices = @transform_8, window_bounds = array<i64: 120, 128>}, {pipeline_mode = #tpu.pipeline_mode<synchronous>, transform_indices = @transform_9, window_bounds = array<i64: 1, 128>}, {transform_indices = @transform_10, window_bounds = array<i64: 2, 128>}]} {
    %c0 = arith.constant 0 : index
    %c0_0 = arith.constant 0 : index
    %0 = vector.load %arg1[%c0, %c0_0] : memref<40x256xbf16, #tpu.memory_space<vmem>>, vector<40x256xbf16>
    %c0_1 = arith.constant 0 : index
    %c0_2 = arith.constant 0 : index
    %1 = vector.load %arg2[%c0_1, %c0_2] : memref<256x384xbf16, #tpu.memory_space<vmem>>, vector<256x384xbf16>
    %cst = arith.constant dense<0.000000e+00> : vector<40x384xf32>
    %2 = tpu.matmul %0, %1, %cst {dimension_numbers = #tpu.dot_dimension_numbers<[1], [0], [0], [1], [0, 0, 1, 1], [], []>} : vector<40x256xbf16>, vector<256x384xbf16>, vector<40x384xf32> -> vector<40x384xf32>
    %3 = vector.extract_strided_slice %2 {offsets = [0, 0], sizes = [38, 108], strides = [1, 1]} : vector<40x384xf32> to vector<38x108xf32>
    %4 = vector.extract_strided_slice %2 {offsets = [1, 128], sizes = [38, 108], strides = [1, 1]} : vector<40x384xf32> to vector<38x108xf32>
    %5 = arith.addf %3, %4 : vector<38x108xf32>
    %6 = vector.extract_strided_slice %2 {offsets = [2, 256], sizes = [38, 108], strides = [1, 1]} : vector<40x384xf32> to vector<38x108xf32>
    %7 = arith.addf %5, %6 : vector<38x108xf32>
    %c0_3 = arith.constant 0 : index
    %c0_4 = arith.constant 0 : index
    %8 = vector.load %arg3[%c0_3, %c0_4] : memref<1x108xf32, #tpu.memory_space<vmem>>, vector<1x108xf32>
    %9 = vector.broadcast %8 : vector<1x108xf32> to vector<38x108xf32>
    %10 = arith.addf %7, %9 : vector<38x108xf32>
    %cst_5 = arith.constant 0.000000e+00 : f32
    %11 = vector.broadcast %cst_5 : f32 to vector<38x108xf32>
    %12 = arith.maximumf %10, %11 : vector<38x108xf32>
    %13 = vector.extract_strided_slice %12 {offsets = [0, 0], sizes = [38, 102], strides = [1, 1]} : vector<38x108xf32> to vector<38x102xf32>
    %14 = vector.extract_strided_slice %12 {offsets = [0, 6], sizes = [38, 102], strides = [1, 1]} : vector<38x108xf32> to vector<38x102xf32>
    %15 = arith.maximumf %13, %14 : vector<38x102xf32>
    %16 = vector.extract_strided_slice %15 {offsets = [0, 0], sizes = [37, 102], strides = [1, 1]} : vector<38x102xf32> to vector<37x102xf32>
    %17 = vector.extract_strided_slice %15 {offsets = [1, 0], sizes = [37, 102], strides = [1, 1]} : vector<38x102xf32> to vector<37x102xf32>
    %18 = arith.maximumf %16, %17 : vector<37x102xf32>
    %19 = arith.truncf %18 : vector<37x102xf32> to vector<37x102xbf16>
    %c0_6 = arith.constant 0 : index
    %c0_7 = arith.constant 0 : index
    %20 = vector.load %arg4[%c0_6, %c0_7] : memref<102x384xbf16, #tpu.memory_space<vmem>>, vector<102x384xbf16>
    %cst_8 = arith.constant dense<0.000000e+00> : vector<37x384xf32>
    %21 = tpu.matmul %19, %20, %cst_8 {dimension_numbers = #tpu.dot_dimension_numbers<[1], [0], [0], [1], [0, 0, 1, 1], [], []>} : vector<37x102xbf16>, vector<102x384xbf16>, vector<37x384xf32> -> vector<37x384xf32>
    %22 = vector.extract_strided_slice %21 {offsets = [0, 0], sizes = [33, 112], strides = [1, 1]} : vector<37x384xf32> to vector<33x112xf32>
    %23 = vector.extract_strided_slice %21 {offsets = [2, 128], sizes = [33, 112], strides = [1, 1]} : vector<37x384xf32> to vector<33x112xf32>
    %24 = arith.addf %22, %23 : vector<33x112xf32>
    %25 = vector.extract_strided_slice %21 {offsets = [4, 256], sizes = [33, 112], strides = [1, 1]} : vector<37x384xf32> to vector<33x112xf32>
    %26 = arith.addf %24, %25 : vector<33x112xf32>
    %c0_9 = arith.constant 0 : index
    %c0_10 = arith.constant 0 : index
    %27 = vector.load %arg5[%c0_9, %c0_10] : memref<1x112xf32, #tpu.memory_space<vmem>>, vector<1x112xf32>
    %28 = vector.broadcast %27 : vector<1x112xf32> to vector<33x112xf32>
    %29 = arith.addf %26, %28 : vector<33x112xf32>
    %cst_11 = arith.constant 0.000000e+00 : f32
    %30 = vector.broadcast %cst_11 : f32 to vector<33x112xf32>
    %31 = arith.maximumf %29, %30 : vector<33x112xf32>
    %32 = vector.extract_strided_slice %31 {offsets = [0, 0], sizes = [33, 96], strides = [1, 1]} : vector<33x112xf32> to vector<33x96xf32>
    %33 = vector.extract_strided_slice %31 {offsets = [0, 16], sizes = [33, 96], strides = [1, 1]} : vector<33x112xf32> to vector<33x96xf32>
    %34 = arith.maximumf %32, %33 : vector<33x96xf32>
    %35 = vector.extract_strided_slice %34 {offsets = [0, 0], sizes = [31, 96], strides = [1, 1]} : vector<33x96xf32> to vector<31x96xf32>
    %36 = vector.extract_strided_slice %34 {offsets = [2, 0], sizes = [31, 96], strides = [1, 1]} : vector<33x96xf32> to vector<31x96xf32>
    %37 = arith.maximumf %35, %36 : vector<31x96xf32>
    %38 = arith.truncf %37 : vector<31x96xf32> to vector<31x96xbf16>
    %c0_12 = arith.constant 0 : index
    %c0_13 = arith.constant 0 : index
    %39 = vector.load %arg6[%c0_12, %c0_13] : memref<96x384xbf16, #tpu.memory_space<vmem>>, vector<96x384xbf16>
    %cst_14 = arith.constant dense<0.000000e+00> : vector<31x384xf32>
    %40 = tpu.matmul %38, %39, %cst_14 {dimension_numbers = #tpu.dot_dimension_numbers<[1], [0], [0], [1], [0, 0, 1, 1], [], []>} : vector<31x96xbf16>, vector<96x384xbf16>, vector<31x384xf32> -> vector<31x384xf32>
    %41 = vector.extract_strided_slice %40 {offsets = [0, 0], sizes = [23, 120], strides = [1, 1]} : vector<31x384xf32> to vector<23x120xf32>
    %42 = vector.extract_strided_slice %40 {offsets = [4, 128], sizes = [23, 120], strides = [1, 1]} : vector<31x384xf32> to vector<23x120xf32>
    %43 = arith.addf %41, %42 : vector<23x120xf32>
    %44 = vector.extract_strided_slice %40 {offsets = [8, 256], sizes = [23, 120], strides = [1, 1]} : vector<31x384xf32> to vector<23x120xf32>
    %45 = arith.addf %43, %44 : vector<23x120xf32>
    %c0_15 = arith.constant 0 : index
    %c0_16 = arith.constant 0 : index
    %46 = vector.load %arg7[%c0_15, %c0_16] : memref<1x120xf32, #tpu.memory_space<vmem>>, vector<1x120xf32>
    %47 = vector.broadcast %46 : vector<1x120xf32> to vector<23x120xf32>
    %48 = arith.addf %45, %47 : vector<23x120xf32>
    %cst_17 = arith.constant 0.000000e+00 : f32
    %49 = vector.broadcast %cst_17 : f32 to vector<23x120xf32>
    %50 = arith.maximumf %48, %49 : vector<23x120xf32>
    %51 = arith.truncf %50 : vector<23x120xf32> to vector<23x120xbf16>
    %c0_18 = arith.constant 0 : index
    %c0_19 = arith.constant 0 : index
    %52 = vector.load %arg8[%c0_18, %c0_19] : memref<2x40xbf16, #tpu.memory_space<vmem>>, vector<2x23xbf16>
    %cst_20 = arith.constant dense<0.000000e+00> : vector<2x120xf32>
    %53 = tpu.matmul %52, %51, %cst_20 {dimension_numbers = #tpu.dot_dimension_numbers<[1], [0], [0], [1], [0, 0, 1, 1], [], []>} : vector<2x23xbf16>, vector<23x120xbf16>, vector<2x120xf32> -> vector<2x120xf32>
    %54 = arith.truncf %53 : vector<2x120xf32> to vector<2x120xbf16>
    %c0_21 = arith.constant 0 : index
    %c0_22 = arith.constant 0 : index
    %55 = vector.load %arg9[%c0_21, %c0_22] : memref<120x128xbf16, #tpu.memory_space<vmem>>, vector<120x128xbf16>
    %cst_23 = arith.constant dense<0.000000e+00> : vector<2x128xf32>
    %56 = tpu.matmul %54, %55, %cst_23 {dimension_numbers = #tpu.dot_dimension_numbers<[1], [0], [0], [1], [0, 0, 1, 1], [], []>} : vector<2x120xbf16>, vector<120x128xbf16>, vector<2x128xf32> -> vector<2x128xf32>
    %c0_24 = arith.constant 0 : index
    %c0_25 = arith.constant 0 : index
    %57 = vector.load %arg10[%c0_24, %c0_25] : memref<1x128xf32, #tpu.memory_space<vmem>>, vector<1x128xf32>
    %58 = vector.broadcast %57 : vector<1x128xf32> to vector<2x128xf32>
    %59 = arith.addf %56, %58 : vector<2x128xf32>
    %cst_26 = arith.constant 0.000000e+00 : f32
    %60 = vector.broadcast %cst_26 : f32 to vector<2x128xf32>
    %61 = arith.maximumf %59, %60 : vector<2x128xf32>
    %c0_27 = arith.constant 0 : index
    %c0_28 = arith.constant 0 : index
    %62 = vector.load %arg11[%c0_27, %c0_28] : memref<2x128xf32, #tpu.memory_space<vmem>>, vector<2x128xf32>
    tpu.vector_store %arg11[%c0_27, %c0_28], %61 {strides = array<i32>} : memref<2x128xf32, #tpu.memory_space<vmem>>, vector<2x128xf32>,
    return
  }
  func.func @transform_0(%arg0: i32) -> (i32, i32) {
    %c0_i32 = arith.constant 0 : i32
    %c0_i32_0 = arith.constant 0 : i32
    return %arg0, %c0_i32 : i32, i32
  }
  func.func @transform_1(%arg0: i32) -> (i32, i32) {
    %c0_i32 = arith.constant 0 : i32
    %c0_i32_0 = arith.constant 0 : i32
    %c0_i32_1 = arith.constant 0 : i32
    return %c0_i32, %c0_i32_0 : i32, i32
  }
  func.func @transform_2(%arg0: i32) -> (i32, i32) {
    %c0_i32 = arith.constant 0 : i32
    %c0_i32_0 = arith.constant 0 : i32
    %c0_i32_1 = arith.constant 0 : i32
    return %c0_i32, %c0_i32_0 : i32, i32
  }
  func.func @transform_3(%arg0: i32) -> (i32, i32) {
    %c0_i32 = arith.constant 0 : i32
    %c0_i32_0 = arith.constant 0 : i32
    %c0_i32_1 = arith.constant 0 : i32
    return %c0_i32, %c0_i32_0 : i32, i32
  }
  func.func @transform_4(%arg0: i32) -> (i32, i32) {
    %c0_i32 = arith.constant 0 : i32
    %c0_i32_0 = arith.constant 0 : i32
    %c0_i32_1 = arith.constant 0 : i32
    return %c0_i32, %c0_i32_0 : i32, i32
  }
  func.func @transform_5(%arg0: i32) -> (i32, i32) {
    %c0_i32 = arith.constant 0 : i32
    %c0_i32_0 = arith.constant 0 : i32
    %c0_i32_1 = arith.constant 0 : i32
    return %c0_i32, %c0_i32_0 : i32, i32
  }
  func.func @transform_6(%arg0: i32) -> (i32, i32) {
    %c0_i32 = arith.constant 0 : i32
    %c0_i32_0 = arith.constant 0 : i32
    %c0_i32_1 = arith.constant 0 : i32
    return %c0_i32, %c0_i32_0 : i32, i32
  }
  func.func @transform_7(%arg0: i32) -> (i32, i32) {
    %c0_i32 = arith.constant 0 : i32
    %c0_i32_0 = arith.constant 0 : i32
    %c0_i32_1 = arith.constant 0 : i32
    return %c0_i32, %c0_i32_0 : i32, i32
  }
  func.func @transform_8(%arg0: i32) -> (i32, i32) {
    %c0_i32 = arith.constant 0 : i32
    %c0_i32_0 = arith.constant 0 : i32
    %c0_i32_1 = arith.constant 0 : i32
    return %c0_i32, %c0_i32_0 : i32, i32
  }
  func.func @transform_9(%arg0: i32) -> (i32, i32) {
    %c0_i32 = arith.constant 0 : i32
    %c0_i32_0 = arith.constant 0 : i32
    %c0_i32_1 = arith.constant 0 : i32
    return %c0_i32, %c0_i32_0 : i32, i32
  }
  func.func @transform_10(%arg0: i32) -> (i32, i32) {
    %c0_i32 = arith.constant 0 : i32
    %c0_i32_0 = arith.constant 0 : i32
    return %arg0, %c0_i32 : i32, i32
  }
}

</mosaic_0001>

<llo_original>
// kernel: _lambda_.1
$region0: #{_lambda_.1}
  #allocation0 [shape = 'u32[]', space=smem, size = 0x4, offset = 0x4, fixed_abs, tag = 'smem constant byte address 0x4 - core index']
  #allocation1 [shape = 'u32[144,128]{1,0:T(1,128)}', space=vmem, size = 0x12000, scoped, tag = 'internal scratch']
  %s0 = inlined_call_operand.vmem [shape: bf16[40,256], index: 0, kind: input, shape index: {}]
  %s1 = inlined_call_operand.vmem [shape: bf16[256,384], index: 1, kind: input, shape index: {}]
  %s2 = inlined_call_operand.vmem [shape: f32[1,108], index: 2, kind: input, shape index: {}]
  %s3 = inlined_call_operand.vmem [shape: bf16[102,384], index: 3, kind: input, shape index: {}]
  %s4 = inlined_call_operand.vmem [shape: f32[1,112], index: 4, kind: input, shape index: {}]
  %s5 = inlined_call_operand.vmem [shape: bf16[96,384], index: 5, kind: input, shape index: {}]
  %s6 = inlined_call_operand.vmem [shape: f32[1,120], index: 6, kind: input, shape index: {}]
  %s7 = inlined_call_operand.vmem [shape: bf16[2,40], index: 7, kind: input, shape index: {}]
  %s8 = inlined_call_operand.vmem [shape: bf16[120,128], index: 8, kind: input, shape index: {}]
  %s9 = inlined_call_operand.vmem [shape: f32[1,128], index: 9, kind: input, shape index: {}]
  %s10 = inlined_call_operand.hbm [shape: f32[2,128], index: 10, kind: output, shape index: {}]
  %s11 = sld [smem:[#allocation0]]
  $region50: #{_lambda_.1} parent=0
    _
  %s13 = ssub.s32 1, %s11
  %s14 = scalar_select 0, %s13, %s11
  $region1: #{_lambda_.1} parent=0
    #allocation2 [shape = 'u8[1024]{0}', space=vmem, size = 0x400, scoped, tag = 'output window, operand 0, single buffered']
    #allocation3 [shape = 's32[1]{0}', space=sflag, size = 0x4, scoped, tag = 'scoped memory for _lambda_.1']
    %15 = vsyncpa [#allocation3], 0
    // Predicated region
    $region2: #{_lambda_.1} parent=1 // pred_check
      _
    $region3: #{_lambda_.1} parent=1 // pred_check_branch
      %17 = sbr.rel (0) target = $region5
    $region4: #{_lambda_.1} parent=1 // pred_region
      _
    $region5: #{_lambda_.1} parent=1 // pred_fallthru
      _
    // Predicated region
    $region6: #{_lambda_.1} parent=1 // pred_check
      _
    $region7: #{_lambda_.1} parent=1 // pred_check_branch
      %19 = sbr.rel (0) target = $region9
    $region8: #{_lambda_.1} parent=1 // pred_region
      _
    $region9: #{_lambda_.1} parent=1 // pred_fallthru
      _
    // Predicated region
    $region10: #{_lambda_.1} parent=1 // pred_check
      _
    $region11: #{_lambda_.1} parent=1 // pred_check_branch
      %21 = sbr.rel (0) target = $region13
    $region12: #{_lambda_.1} parent=1 // pred_region
      _
    $region13: #{_lambda_.1} parent=1 // pred_fallthru
      _
    // Predicated region
    $region14: #{_lambda_.1} parent=1 // pred_check
      _
    $region15: #{_lambda_.1} parent=1 // pred_check_branch
      %23 = sbr.rel (0) target = $region17
    $region16: #{_lambda_.1} parent=1 // pred_region
      _
    $region17: #{_lambda_.1} parent=1 // pred_fallthru
      _
    // Predicated region
    $region18: #{_lambda_.1} parent=1 // pred_check
      _
    $region19: #{_lambda_.1} parent=1 // pred_check_branch
      %25 = sbr.rel (0) target = $region21
    $region20: #{_lambda_.1} parent=1 // pred_region
      _
    $region21: #{_lambda_.1} parent=1 // pred_fallthru
      _
    // Predicated region
    $region22: #{_lambda_.1} parent=1 // pred_check
      _
    $region23: #{_lambda_.1} parent=1 // pred_check_branch
      %27 = sbr.rel (0) target = $region25
    $region24: #{_lambda_.1} parent=1 // pred_region
      _
    $region25: #{_lambda_.1} parent=1 // pred_fallthru
      _
    // Predicated region
    $region26: #{_lambda_.1} parent=1 // pred_check
      _
    $region27: #{_lambda_.1} parent=1 // pred_check_branch
      %29 = sbr.rel (0) target = $region29
    $region28: #{_lambda_.1} parent=1 // pred_region
      _
    $region29: #{_lambda_.1} parent=1 // pred_fallthru
      _
    // Predicated region
    $region30: #{_lambda_.1} parent=1 // pred_check
      _
    $region31: #{_lambda_.1} parent=1 // pred_check_branch
      %31 = sbr.rel (0) target = $region33
    $region32: #{_lambda_.1} parent=1 // pred_region
      _
    $region33: #{_lambda_.1} parent=1 // pred_fallthru
      _
    // Predicated region
    $region34: #{_lambda_.1} parent=1 // pred_check
      _
    $region35: #{_lambda_.1} parent=1 // pred_check_branch
      %33 = sbr.rel (0) target = $region37
    $region36: #{_lambda_.1} parent=1 // pred_region
      _
    $region37: #{_lambda_.1} parent=1 // pred_fallthru
      _
    // Predicated region
    $region38: #{_lambda_.1} parent=1 // pred_check
      _
    $region39: #{_lambda_.1} parent=1 // pred_check_branch
      %35 = sbr.rel (0) target = $region41
    $region40: #{_lambda_.1} parent=1 // pred_region
      _
    $region41: #{_lambda_.1} parent=1 // pred_fallthru
      _
    %v37 = vld [vmem:[%s0] sm:$0xff]
    %v38 = vld [vmem:[%s0 + $0x8] sm:$0xff]
    %v39 = vld [vmem:[%s0 + $0x10] sm:$0xff]
    %v40 = vld [vmem:[%s0 + $0x18] sm:$0xff]
    %v41 = vld [vmem:[%s0 + $0x20] sm:$0xff]
    %v42 = vld [vmem:[%s1] sm:$0xff]
    %v43 = vld [vmem:[%s1 + $0x8] sm:$0xf]
    %v44 = vld [vmem:[%s1 + $0xc] sm:$0xff]
    %v45 = vld [vmem:[%s1 + $0x14] sm:$0xf]
    %v46 = vld [vmem:[%s1 + $0x18] sm:$0xff]
    %v47 = vld [vmem:[%s1 + $0x20] sm:$0xf]
    %v48 = vld [vmem:[%s1 + $0x24] sm:$0xff]
    %v49 = vld [vmem:[%s1 + $0x2c] sm:$0xf]
    %v50 = vld [vmem:[%s1 + $0x30] sm:$0xff]
    %v51 = vld [vmem:[%s1 + $0x38] sm:$0xf]
    %v52 = vld [vmem:[%s1 + $0x3c] sm:$0xff]
    %v53 = vld [vmem:[%s1 + $0x44] sm:$0xf]
    %v54 = vld [vmem:[%s1 + $0x48] sm:$0xff]
    %v55 = vld [vmem:[%s1 + $0x50] sm:$0xf]
    %v56 = vld [vmem:[%s1 + $0x54] sm:$0xff]
    %v57 = vld [vmem:[%s1 + $0x5c] sm:$0xf]
    %v58 = vld [vmem:[%s1 + $0x60] sm:$0xff]
    %v59 = vld [vmem:[%s1 + $0x68] sm:$0xf]
    %v60 = vld [vmem:[%s1 + $0x6c] sm:$0xff]
    %v61 = vld [vmem:[%s1 + $0x74] sm:$0xf]
    %v62 = vld [vmem:[%s1 + $0x78] sm:$0xff]
    %v63 = vld [vmem:[%s1 + $0x80] sm:$0xf]
    %v64 = vld [vmem:[%s1 + $0x84] sm:$0xff]
    %v65 = vld [vmem:[%s1 + $0x8c] sm:$0xf]
    %v66 = vld [vmem:[%s1 + $0x90] sm:$0xff]
    %v67 = vld [vmem:[%s1 + $0x98] sm:$0xf]
    %v68 = vld [vmem:[%s1 + $0x9c] sm:$0xff]
    %v69 = vld [vmem:[%s1 + $0xa4] sm:$0xf]
    %v70 = vld [vmem:[%s1 + $0xa8] sm:$0xff]
    %v71 = vld [vmem:[%s1 + $0xb0] sm:$0xf]
    %v72 = vld [vmem:[%s1 + $0xb4] sm:$0xff]
    %v73 = vld [vmem:[%s1 + $0xbc] sm:$0xf]
    %v74 = vld [vmem:[%s1 + $0xc0] sm:$0xff]
    %v75 = vld [vmem:[%s1 + $0xc8] sm:$0xf]
    %v76 = vld [vmem:[%s1 + $0xcc] sm:$0xff]
    %v77 = vld [vmem:[%s1 + $0xd4] sm:$0xf]
    %v78 = vld [vmem:[%s1 + $0xd8] sm:$0xff]
    %v79 = vld [vmem:[%s1 + $0xe0] sm:$0xf]
    %v80 = vld [vmem:[%s1 + $0xe4] sm:$0xff]
    %v81 = vld [vmem:[%s1 + $0xec] sm:$0xf]
    %v82 = vld [vmem:[%s1 + $0xf0] sm:$0xff]
    %v83 = vld [vmem:[%s1 + $0xf8] sm:$0xf]
    %v84 = vld [vmem:[%s1 + $0xfc] sm:$0xff]
    %v85 = vld [vmem:[%s1 + $0x104] sm:$0xf]
    %v86 = vld [vmem:[%s1 + $0x108] sm:$0xff]
    %v87 = vld [vmem:[%s1 + $0x110] sm:$0xf]
    %v88 = vld [vmem:[%s1 + $0x114] sm:$0xff]
    %v89 = vld [vmem:[%s1 + $0x11c] sm:$0xf]
    %v90 = vld [vmem:[%s1 + $0x120] sm:$0xff]
    %v91 = vld [vmem:[%s1 + $0x128] sm:$0xf]
    %v92 = vld [vmem:[%s1 + $0x12c] sm:$0xff]
    %v93 = vld [vmem:[%s1 + $0x134] sm:$0xf]
    %v94 = vld [vmem:[%s1 + $0x138] sm:$0xff]
    %v95 = vld [vmem:[%s1 + $0x140] sm:$0xf]
    %v96 = vld [vmem:[%s1 + $0x144] sm:$0xff]
    %v97 = vld [vmem:[%s1 + $0x14c] sm:$0xf]
    %v98 = vld [vmem:[%s1 + $0x150] sm:$0xff]
    %v99 = vld [vmem:[%s1 + $0x158] sm:$0xf]
    %v100 = vld [vmem:[%s1 + $0x15c] sm:$0xff]
    %v101 = vld [vmem:[%s1 + $0x164] sm:$0xf]
    %v102 = vld [vmem:[%s1 + $0x168] sm:$0xff]
    %v103 = vld [vmem:[%s1 + $0x170] sm:$0xf]
    %v104 = vld [vmem:[%s1 + $0x174] sm:$0xff]
    %v105 = vld [vmem:[%s1 + $0x17c] sm:$0xf]
    %v111 = vunpack.c.l.b16 %v37
    %v112 = vunpack.c.h.b16 %v37
    %v113 = vunpack.c.l.b16 %v38
    %v114 = vunpack.c.h.b16 %v38
    %v115 = vunpack.c.l.b16 %v39
    %v116 = vunpack.c.h.b16 %v39
    %v117 = vunpack.c.l.b16 %v40
    %v118 = vunpack.c.h.b16 %v40
    %v119 = vunpack.c.l.b16 %v41
    %v120 = vunpack.c.h.b16 %v41
    %v121 = vpack.c.b16 %v113, %v111
    %v122 = vpack.c.b16 %v114, %v112
    %v123 = vpack.c.b16 %v117, %v115
    %v124 = vpack.c.b16 %v118, %v116
    %v125 = vpack.c.b16 %v119, %v119
    %v126 = vpack.c.b16 %v120, %v120
    %v197 = vunpack.c.l.b16 %v42
    %v198 = vunpack.c.h.b16 %v42
    %v199 = vunpack.c.l.b16 %v43
    %v200 = vunpack.c.l.b16 %v44
    %v201 = vunpack.c.h.b16 %v44
    %v202 = vunpack.c.l.b16 %v45
    %v203 = vunpack.c.l.b16 %v46
    %v204 = vunpack.c.h.b16 %v46
    %v205 = vunpack.c.l.b16 %v47
    %v206 = vunpack.c.l.b16 %v48
    %v207 = vunpack.c.h.b16 %v48
    %v208 = vunpack.c.l.b16 %v49
    %v209 = vunpack.c.l.b16 %v50
    %v210 = vunpack.c.h.b16 %v50
    %v211 = vunpack.c.l.b16 %v51
    %v212 = vunpack.c.l.b16 %v52
    %v213 = vunpack.c.h.b16 %v52
    %v214 = vunpack.c.l.b16 %v53
    %v215 = vunpack.c.l.b16 %v54
    %v216 = vunpack.c.h.b16 %v54
    %v217 = vunpack.c.l.b16 %v55
    %v218 = vunpack.c.l.b16 %v56
    %v219 = vunpack.c.h.b16 %v56
    %v220 = vunpack.c.l.b16 %v57
    %v221 = vunpack.c.l.b16 %v58
    %v222 = vunpack.c.h.b16 %v58
    %v223 = vunpack.c.l.b16 %v59
    %v224 = vunpack.c.l.b16 %v60
    %v225 = vunpack.c.h.b16 %v60
    %v226 = vunpack.c.l.b16 %v61
    %v227 = vunpack.c.l.b16 %v62
    %v228 = vunpack.c.h.b16 %v62
    %v229 = vunpack.c.l.b16 %v63
    %v230 = vunpack.c.l.b16 %v64
    %v231 = vunpack.c.h.b16 %v64
    %v232 = vunpack.c.l.b16 %v65
    %v233 = vunpack.c.l.b16 %v66
    %v234 = vunpack.c.h.b16 %v66
    %v235 = vunpack.c.l.b16 %v67
    %v236 = vunpack.c.l.b16 %v68
    %v237 = vunpack.c.h.b16 %v68
    %v238 = vunpack.c.l.b16 %v69
    %v239 = vunpack.c.l.b16 %v70
    %v240 = vunpack.c.h.b16 %v70
    %v241 = vunpack.c.l.b16 %v71
    %v242 = vunpack.c.l.b16 %v72
    %v243 = vunpack.c.h.b16 %v72
    %v244 = vunpack.c.l.b16 %v73
    %v245 = vunpack.c.l.b16 %v74
    %v246 = vunpack.c.h.b16 %v74
    %v247 = vunpack.c.l.b16 %v75
    %v248 = vunpack.c.l.b16 %v76
    %v249 = vunpack.c.h.b16 %v76
    %v250 = vunpack.c.l.b16 %v77
    %v251 = vunpack.c.l.b16 %v78
    %v252 = vunpack.c.h.b16 %v78
    %v253 = vunpack.c.l.b16 %v79
    %v254 = vunpack.c.l.b16 %v80
    %v255 = vunpack.c.h.b16 %v80
    %v256 = vunpack.c.l.b16 %v81
    %v257 = vunpack.c.l.b16 %v82
    %v258 = vunpack.c.h.b16 %v82
    %v259 = vunpack.c.l.b16 %v83
    %v260 = vunpack.c.l.b16 %v84
    %v261 = vunpack.c.h.b16 %v84
    %v262 = vunpack.c.l.b16 %v85
    %v263 = vunpack.c.l.b16 %v86
    %v264 = vunpack.c.h.b16 %v86
    %v265 = vunpack.c.l.b16 %v87
    %v266 = vunpack.c.l.b16 %v88
    %v267 = vunpack.c.h.b16 %v88
    %v268 = vunpack.c.l.b16 %v89
    %v269 = vunpack.c.l.b16 %v90
    %v270 = vunpack.c.h.b16 %v90
    %v271 = vunpack.c.l.b16 %v91
    %v272 = vunpack.c.l.b16 %v92
    %v273 = vunpack.c.h.b16 %v92
    %v274 = vunpack.c.l.b16 %v93
    %v275 = vunpack.c.l.b16 %v94
    %v276 = vunpack.c.h.b16 %v94
    %v277 = vunpack.c.l.b16 %v95
    %v278 = vunpack.c.l.b16 %v96
    %v279 = vunpack.c.h.b16 %v96
    %v280 = vunpack.c.l.b16 %v97
    %v281 = vunpack.c.l.b16 %v98
    %v282 = vunpack.c.h.b16 %v98
    %v283 = vunpack.c.l.b16 %v99
    %v284 = vunpack.c.l.b16 %v100
    %v285 = vunpack.c.h.b16 %v100
    %v286 = vunpack.c.l.b16 %v101
    %v287 = vunpack.c.l.b16 %v102
    %v288 = vunpack.c.h.b16 %v102
    %v289 = vunpack.c.l.b16 %v103
    %v290 = vunpack.c.l.b16 %v104
    %v291 = vunpack.c.h.b16 %v104
    %v292 = vunpack.c.l.b16 %v105
    %v293 = vpack.c.b16 %v200, %v197
    %v294 = vpack.c.b16 %v201, %v198
    %v295 = vpack.c.b16 %v202, %v199
    %v296 = vpack.c.b16 %v206, %v203
    %v297 = vpack.c.b16 %v207, %v204
    %v298 = vpack.c.b16 %v208, %v205
    %v299 = vpack.c.b16 %v212, %v209
    %v300 = vpack.c.b16 %v213, %v210
    %v301 = vpack.c.b16 %v214, %v211
    %v302 = vpack.c.b16 %v218, %v215
    %v303 = vpack.c.b16 %v219, %v216
    %v304 = vpack.c.b16 %v220, %v217
    %v305 = vpack.c.b16 %v224, %v221
    %v306 = vpack.c.b16 %v225, %v222
    %v307 = vpack.c.b16 %v226, %v223
    %v308 = vpack.c.b16 %v230, %v227
    %v309 = vpack.c.b16 %v231, %v228
    %v310 = vpack.c.b16 %v232, %v229
    %v311 = vpack.c.b16 %v236, %v233
    %v312 = vpack.c.b16 %v237, %v234
    %v313 = vpack.c.b16 %v238, %v235
    %v314 = vpack.c.b16 %v242, %v239
    %v315 = vpack.c.b16 %v243, %v240
    %v316 = vpack.c.b16 %v244, %v241
    %v317 = vpack.c.b16 %v248, %v245
    %v318 = vpack.c.b16 %v249, %v246
    %v319 = vpack.c.b16 %v250, %v247
    %v320 = vpack.c.b16 %v254, %v251
    %v321 = vpack.c.b16 %v255, %v252
    %v322 = vpack.c.b16 %v256, %v253
    %v323 = vpack.c.b16 %v260, %v257
    %v324 = vpack.c.b16 %v261, %v258
    %v325 = vpack.c.b16 %v262, %v259
    %v326 = vpack.c.b16 %v266, %v263
    %v327 = vpack.c.b16 %v267, %v264
    %v328 = vpack.c.b16 %v268, %v265
    %v329 = vpack.c.b16 %v272, %v269
    %v330 = vpack.c.b16 %v273, %v270
    %v331 = vpack.c.b16 %v274, %v271
    %v332 = vpack.c.b16 %v278, %v275
    %v333 = vpack.c.b16 %v279, %v276
    %v334 = vpack.c.b16 %v280, %v277
    %v335 = vpack.c.b16 %v284, %v281
    %v336 = vpack.c.b16 %v285, %v282
    %v337 = vpack.c.b16 %v286, %v283
    %v338 = vpack.c.b16 %v290, %v287
    %v339 = vpack.c.b16 %v291, %v288
    %v340 = vpack.c.b16 %v292, %v289
    %389 = vmatprep.subr.bf16.mxu0 %v294
    %390 = vmatpush1.bf16.msra.mxu0 %v293
    %391 = vmatprep.subr.bf16.mxu0 %v297
    %392 = vmatpush1.bf16.msra.mxu0 %v296
    %393 = vmatprep.subr.bf16.mxu0 %v300
    %394 = vmatpush1.bf16.msra.mxu0 %v299
    %395 = vmatprep.subr.bf16.mxu0 %v303
    %396 = vmatpush1.bf16.msra.mxu0 %v302
    %397 = vmatprep.subr.bf16.mxu0 %v306
    %398 = vmatpush1.bf16.msra.mxu0 %v305
    %399 = vmatprep.subr.bf16.mxu0 %v309
    %400 = vmatpush1.bf16.msra.mxu0 %v308
    %401 = vmatprep.subr.bf16.mxu0 %v312
    %402 = vmatpush1.bf16.msra.mxu0 %v311
    %403 = vmatprep.subr.bf16.mxu0 %v315
    %404 = vmatpush1.bf16.msra.mxu0 %v314
    %405 = vmatprep.subr.bf16.mxu0 %v318
    %406 = vmatpush1.bf16.msra.mxu0 %v317
    %407 = vmatprep.subr.bf16.mxu0 %v321
    %408 = vmatpush1.bf16.msra.mxu0 %v320
    %409 = vmatprep.subr.bf16.mxu0 %v324
    %410 = vmatpush1.bf16.msra.mxu0 %v323
    %411 = vmatprep.subr.bf16.mxu0 %v327
    %412 = vmatpush1.bf16.msra.mxu0 %v326
    %413 = vmatprep.subr.bf16.mxu0 %v330
    %414 = vmatpush1.bf16.msra.mxu0 %v329
    %415 = vmatprep.subr.bf16.mxu0 %v333
    %416 = vmatpush1.bf16.msra.mxu0 %v332
    %417 = vmatprep.subr.bf16.mxu0 %v336
    %418 = vmatpush1.bf16.msra.mxu0 %v335
    %419 = vmatprep.subr.bf16.mxu0 %v339
    %420 = vmatpush1.bf16.msra.mxu0 %v338
    %421 = vmatprep.mubr.bf16.mxu0 %v122
    %422 = vmatmul.mubr.bf16.gmra.mrb[0].mxu0 %v121
    %v423 = vpop.f32.mrb[0].mxu0
    %v424 = vadd.f32 0.0, %v423
    %v425 = vpop.f32.mrb[0].mxu0
    %v426 = vadd.f32 0.0, %v425
    %v427 = vpop.f32.mrb[0].mxu0
    %v428 = vadd.f32 0.0, %v427
    %v429 = vpop.f32.mrb[0].mxu0
    %v430 = vadd.f32 0.0, %v429
    %431 = vmatprep.mubr.bf16.mxu0 %v124
    %432 = vmatmul.mubr.bf16.gmra.mrb[0].mxu0 %v123
    %v433 = vpop.f32.mrb[0].mxu0
    %v434 = vadd.f32 0.0, %v433
    %v435 = vpop.f32.mrb[0].mxu0
    %v436 = vadd.f32 0.0, %v435
    %v437 = vpop.f32.mrb[0].mxu0
    %v438 = vadd.f32 0.0, %v437
    %v439 = vpop.f32.mrb[0].mxu0
    %v440 = vadd.f32 0.0, %v439
    %441 = vmatprep.mubr.bf16.mxu0 %v126
    %442 = vmatmul.mubr.bf16.gmra.mrb[0].mxu0 %v125
    %v443 = vpop.f32.mrb[0].mxu0
    %v444 = vadd.f32 0.0, %v443
    %v445 = vpop.f32.mrb[0].mxu0
    %v446 = vadd.f32 0.0, %v445
    %v447 = vpop.f32.mrb[0].mxu0
    %v448 = vpop.f32.mrb[0].mxu0
    %449 = vdwg.mxu0
    %450 = vmatprep.subr.bf16.mxu0 0
    %451 = vmatpush1.bf16.msra.mxu0 %v295
    %452 = vmatprep.subr.bf16.mxu0 0
    %453 = vmatpush1.bf16.msra.mxu0 %v298
    %454 = vmatprep.subr.bf16.mxu0 0
    %455 = vmatpush1.bf16.msra.mxu0 %v301
    %456 = vmatprep.subr.bf16.mxu0 0
    %457 = vmatpush1.bf16.msra.mxu0 %v304
    %458 = vmatprep.subr.bf16.mxu0 0
    %459 = vmatpush1.bf16.msra.mxu0 %v307
    %460 = vmatprep.subr.bf16.mxu0 0
    %461 = vmatpush1.bf16.msra.mxu0 %v310
    %462 = vmatprep.subr.bf16.mxu0 0
    %463 = vmatpush1.bf16.msra.mxu0 %v313
    %464 = vmatprep.subr.bf16.mxu0 0
    %465 = vmatpush1.bf16.msra.mxu0 %v316
    %466 = vmatprep.subr.bf16.mxu0 0
    %467 = vmatpush1.bf16.msra.mxu0 %v319
    %468 = vmatprep.subr.bf16.mxu0 0
    %469 = vmatpush1.bf16.msra.mxu0 %v322
    %470 = vmatprep.subr.bf16.mxu0 0
    %471 = vmatpush1.bf16.msra.mxu0 %v325
    %472 = vmatprep.subr.bf16.mxu0 0
    %473 = vmatpush1.bf16.msra.mxu0 %v328
    %474 = vmatprep.subr.bf16.mxu0 0
    %475 = vmatpush1.bf16.msra.mxu0 %v331
    %476 = vmatprep.subr.bf16.mxu0 0
    %477 = vmatpush1.bf16.msra.mxu0 %v334
    %478 = vmatprep.subr.bf16.mxu0 0
    %479 = vmatpush1.bf16.msra.mxu0 %v337
    %480 = vmatprep.subr.bf16.mxu0 0
    %481 = vmatpush1.bf16.msra.mxu0 %v340
    %482 = vmatprep.mubr.bf16.mxu0 %v122
    %483 = vmatmul.mubr.bf16.gmra.mrb[0].mxu0 %v121
    %v484 = vpop.f32.mrb[0].mxu0
    %v485 = vadd.f32 0.0, %v484
    %v486 = vpop.f32.mrb[0].mxu0
    %v487 = vpop.f32.mrb[0].mxu0
    %v488 = vadd.f32 0.0, %v487
    %v489 = vpop.f32.mrb[0].mxu0
    %490 = vmatprep.mubr.bf16.mxu0 %v124
    %491 = vmatmul.mubr.bf16.gmra.mrb[0].mxu0 %v123
    %v492 = vpop.f32.mrb[0].mxu0
    %v493 = vadd.f32 0.0, %v492
    %v494 = vpop.f32.mrb[0].mxu0
    %v495 = vpop.f32.mrb[0].mxu0
    %v496 = vadd.f32 0.0, %v495
    %v497 = vpop.f32.mrb[0].mxu0
    %498 = vmatprep.mubr.bf16.mxu0 %v126
    %499 = vmatmul.mubr.bf16.gmra.mrb[0].mxu0 %v125
    %v500 = vpop.f32.mrb[0].mxu0
    %v501 = vadd.f32 0.0, %v500
    %v502 = vpop.f32.mrb[0].mxu0
    %v503 = vpop.f32.mrb[0].mxu0
    %v504 = vpop.f32.mrb[0].mxu0
    %505 = vdwg.mxu0
    %vm511 = vcmask 1046528
    %v512 = vrot.slane %v426, 1
    %v513 = vrot.slane %v430, 1
    %v514 = vsel %vm511, %v512, %v513
    %v515 = vrot.slane %v436, 1
    %v516 = vsel %vm511, %v513, %v515
    %v517 = vrot.slane %v440, 1
    %v518 = vsel %vm511, %v515, %v517
    %v519 = vrot.slane %v446, 1
    %v520 = vsel %vm511, %v517, %v519
    %v526 = vadd.f32 %v424, %v514
    %v527 = vadd.f32 %v428, %v516
    %v528 = vadd.f32 %v434, %v518
    %v529 = vadd.f32 %v438, %v520
    %v530 = vadd.f32 %v444, %v519
    %vm536 = vcmask 1045504
    %v537 = vrot.slane %v485, 2
    %v538 = vrot.slane %v488, 2
    %v539 = vsel %vm536, %v537, %v538
    %v540 = vrot.slane %v493, 2
    %v541 = vsel %vm536, %v538, %v540
    %v542 = vrot.slane %v496, 2
    %v543 = vsel %vm536, %v540, %v542
    %v544 = vrot.slane %v501, 2
    %v545 = vsel %vm536, %v542, %v544
    %v551 = vadd.f32 %v526, %v539
    %v552 = vadd.f32 %v527, %v541
    %v553 = vadd.f32 %v528, %v543
    %v554 = vadd.f32 %v529, %v545
    %v555 = vadd.f32 %v530, %v544
    %v556 = vld [vmem:[%s2] sm:$0x1]
    %v558 = vlaneseq
    %v559 = vshrl.u32 %v558, 7
    %v560 = vsub.s32 0, %v559
    %v561 = vrot.slane %v556, %v560
    %v563 = vadd.f32 %v551, %v561
    %v564 = vadd.f32 %v552, %v561
    %v565 = vadd.f32 %v553, %v561
    %v566 = vadd.f32 %v554, %v561
    %v567 = vadd.f32 %v555, %v561
    %v568 = vmax.f32 %v563, 0.0
    %v569 = vmax.f32 %v564, 0.0
    %v570 = vmax.f32 %v565, 0.0
    %v571 = vmax.f32 %v566, 0.0
    %v572 = vmax.f32 %v567, 0.0
    %578 = vrot.lane.b32.xlu0 %v568, 122
    %v579 = vpop.permute.xlu0 %578
    %580 = vrot.lane.b32.xlu0 %v569, 122
    %v581 = vpop.permute.xlu0 %580
    %582 = vrot.lane.b32.xlu0 %v570, 122
    %v583 = vpop.permute.xlu0 %582
    %584 = vrot.lane.b32.xlu0 %v571, 122
    %v585 = vpop.permute.xlu0 %584
    %586 = vrot.lane.b32.xlu0 %v572, 122
    %v587 = vpop.permute.xlu0 %586
    %v593 = vmax.f32 %v568, %v579
    %v594 = vmax.f32 %v569, %v581
    %v595 = vmax.f32 %v570, %v583
    %v596 = vmax.f32 %v571, %v585
    %v597 = vmax.f32 %v572, %v587
    %v603 = vrot.slane %v593, 1
    %v604 = vrot.slane %v594, 1
    %v605 = vsel %vm511, %v603, %v604
    %v606 = vrot.slane %v595, 1
    %v607 = vsel %vm511, %v604, %v606
    %v608 = vrot.slane %v596, 1
    %v609 = vsel %vm511, %v606, %v608
    %v610 = vrot.slane %v597, 1
    %v611 = vsel %vm511, %v608, %v610
    %v617 = vmax.f32 %v593, %v605
    %v618 = vmax.f32 %v594, %v607
    %v619 = vmax.f32 %v595, %v609
    %v620 = vmax.f32 %v596, %v611
    %v621 = vmax.f32 %v597, %v610
    %v622 = vpack.c.bf16 %v618, %v617
    %v623 = vpack.c.bf16 %v620, %v619
    %v624 = vpack.c.bf16 %v621, %v621
    %v625 = vld [vmem:[%s3] sm:$0xff]
    %v626 = vld [vmem:[%s3 + $0x8] sm:$0xf]
    %v627 = vld [vmem:[%s3 + $0xc] sm:$0xff]
    %v628 = vld [vmem:[%s3 + $0x14] sm:$0xf]
    %v629 = vld [vmem:[%s3 + $0x18] sm:$0xff]
    %v630 = vld [vmem:[%s3 + $0x20] sm:$0xf]
    %v631 = vld [vmem:[%s3 + $0x24] sm:$0xff]
    %v632 = vld [vmem:[%s3 + $0x2c] sm:$0xf]
    %v633 = vld [vmem:[%s3 + $0x30] sm:$0xff]
    %v634 = vld [vmem:[%s3 + $0x38] sm:$0xf]
    %v635 = vld [vmem:[%s3 + $0x3c] sm:$0xff]
    %v636 = vld [vmem:[%s3 + $0x44] sm:$0xf]
    %v637 = vld [vmem:[%s3 + $0x48] sm:$0xff]
    %v638 = vld [vmem:[%s3 + $0x50] sm:$0xf]
    %v639 = vld [vmem:[%s3 + $0x54] sm:$0xff]
    %v640 = vld [vmem:[%s3 + $0x5c] sm:$0xf]
    %v641 = vld [vmem:[%s3 + $0x60] sm:$0xff]
    %v642 = vld [vmem:[%s3 + $0x68] sm:$0xf]
    %v643 = vld [vmem:[%s3 + $0x6c] sm:$0xff]
    %v644 = vld [vmem:[%s3 + $0x74] sm:$0xf]
    %v645 = vld [vmem:[%s3 + $0x78] sm:$0xff]
    %v646 = vld [vmem:[%s3 + $0x80] sm:$0xf]
    %v647 = vld [vmem:[%s3 + $0x84] sm:$0xff]
    %v648 = vld [vmem:[%s3 + $0x8c] sm:$0xf]
    %v649 = vld [vmem:[%s3 + $0x90] sm:$0x77]
    %v650 = vld [vmem:[%s3 + $0x98] sm:$0x7]
    %v677 = vunpack.c.l.b16 %v625
    %v678 = vunpack.c.h.b16 %v625
    %v679 = vunpack.c.l.b16 %v626
    %v680 = vunpack.c.l.b16 %v627
    %v681 = vunpack.c.h.b16 %v627
    %v682 = vunpack.c.l.b16 %v628
    %v683 = vunpack.c.l.b16 %v629
    %v684 = vunpack.c.h.b16 %v629
    %v685 = vunpack.c.l.b16 %v630
    %v686 = vunpack.c.l.b16 %v631
    %v687 = vunpack.c.h.b16 %v631
    %v688 = vunpack.c.l.b16 %v632
    %v689 = vunpack.c.l.b16 %v633
    %v690 = vunpack.c.h.b16 %v633
    %v691 = vunpack.c.l.b16 %v634
    %v692 = vunpack.c.l.b16 %v635
    %v693 = vunpack.c.h.b16 %v635
    %v694 = vunpack.c.l.b16 %v636
    %v695 = vunpack.c.l.b16 %v637
    %v696 = vunpack.c.h.b16 %v637
    %v697 = vunpack.c.l.b16 %v638
    %v698 = vunpack.c.l.b16 %v639
    %v699 = vunpack.c.h.b16 %v639
    %v700 = vunpack.c.l.b16 %v640
    %v701 = vunpack.c.l.b16 %v641
    %v702 = vunpack.c.h.b16 %v641
    %v703 = vunpack.c.l.b16 %v642
    %v704 = vunpack.c.l.b16 %v643
    %v705 = vunpack.c.h.b16 %v643
    %v706 = vunpack.c.l.b16 %v644
    %v707 = vunpack.c.l.b16 %v645
    %v708 = vunpack.c.h.b16 %v645
    %v709 = vunpack.c.l.b16 %v646
    %v710 = vunpack.c.l.b16 %v647
    %v711 = vunpack.c.h.b16 %v647
    %v712 = vunpack.c.l.b16 %v648
    %v713 = vunpack.c.l.b16 %v649
    %v714 = vunpack.c.h.b16 %v649
    %v715 = vunpack.c.l.b16 %v650
    %v716 = vpack.c.b16 %v680, %v677
    %v717 = vpack.c.b16 %v681, %v678
    %v718 = vpack.c.b16 %v682, %v679
    %v719 = vpack.c.b16 %v686, %v683
    %v720 = vpack.c.b16 %v687, %v684
    %v721 = vpack.c.b16 %v688, %v685
    %v722 = vpack.c.b16 %v692, %v689
    %v723 = vpack.c.b16 %v693, %v690
    %v724 = vpack.c.b16 %v694, %v691
    %v725 = vpack.c.b16 %v698, %v695
    %v726 = vpack.c.b16 %v699, %v696
    %v727 = vpack.c.b16 %v700, %v697
    %v728 = vpack.c.b16 %v704, %v701
    %v729 = vpack.c.b16 %v705, %v702
    %v730 = vpack.c.b16 %v706, %v703
    %v731 = vpack.c.b16 %v710, %v707
    %v732 = vpack.c.b16 %v711, %v708
    %v733 = vpack.c.b16 %v712, %v709
    %v734 = vpack.c.b16 %v713, %v713
    %v735 = vpack.c.b16 %v714, %v714
    %v736 = vpack.c.b16 %v715, %v715
    %vm755 = vcmask 834560
    %v757 = vsel %vm755, %v622, 0
    %v760 = vsel %vm755, %v623, 0
    %v763 = vsel %vm755, %v624, 0
    %vm765 = vcmask 1042432
    %v767 = vsel %vm765, %v734, 0
    %v770 = vsel %vm765, %v735, 0
    %v773 = vsel %vm765, %v736, 0
    %775 = vmatprep.subr.bf16.mxu0 %v717
    %776 = vmatpush1.bf16.msra.mxu0 %v716
    %777 = vmatprep.subr.bf16.mxu0 %v720
    %778 = vmatpush1.bf16.msra.mxu0 %v719
    %779 = vmatprep.subr.bf16.mxu0 %v723
    %780 = vmatpush1.bf16.msra.mxu0 %v722
    %781 = vmatprep.subr.bf16.mxu0 %v726
    %782 = vmatpush1.bf16.msra.mxu0 %v725
    %783 = vmatprep.subr.bf16.mxu0 %v729
    %784 = vmatpush1.bf16.msra.mxu0 %v728
    %785 = vmatprep.subr.bf16.mxu0 %v732
    %786 = vmatpush1.bf16.msra.mxu0 %v731
    %787 = vmatprep.subr.bf16.mxu0 %v770
    %788 = vmatpush1.bf16.msra.mxu0 %v767
    %789 = vmatprep.subr.bf16.mxu0 0
    %790 = vmatpush1.bf16.msra.mxu0 0
    %791 = vmatprep.subr.bf16.mxu0 0
    %792 = vmatpush1.bf16.msra.mxu0 0
    %793 = vmatprep.subr.bf16.mxu0 0
    %794 = vmatpush1.bf16.msra.mxu0 0
    %795 = vmatprep.subr.bf16.mxu0 0
    %796 = vmatpush1.bf16.msra.mxu0 0
    %797 = vmatprep.subr.bf16.mxu0 0
    %798 = vmatpush1.bf16.msra.mxu0 0
    %799 = vmatprep.subr.bf16.mxu0 0
    %800 = vmatpush1.bf16.msra.mxu0 0
    %801 = vmatprep.subr.bf16.mxu0 0
    %802 = vmatpush1.bf16.msra.mxu0 0
    %803 = vmatprep.subr.bf16.mxu0 0
    %804 = vmatpush1.bf16.msra.mxu0 0
    %805 = vmatprep.subr.bf16.mxu0 0
    %806 = vmatpush1.bf16.msra.mxu0 0
    %807 = vmatprep.mubr.bf16.mxu0 0
    %808 = vmatmul.mubr.bf16.gmra.mrb[0].mxu0 %v757
    %v809 = vpop.f32.mrb[0].mxu0
    %v810 = vadd.f32 0.0, %v809
    %v811 = vpop.f32.mrb[0].mxu0
    %v812 = vadd.f32 0.0, %v811
    %v813 = vpop.f32.mrb[0].mxu0
    %v814 = vadd.f32 0.0, %v813
    %v815 = vpop.f32.mrb[0].mxu0
    %v816 = vadd.f32 0.0, %v815
    %817 = vmatprep.mubr.bf16.mxu0 0
    %818 = vmatmul.mubr.bf16.gmra.mrb[0].mxu0 %v760
    %v819 = vpop.f32.mrb[0].mxu0
    %v820 = vadd.f32 0.0, %v819
    %v821 = vpop.f32.mrb[0].mxu0
    %v822 = vadd.f32 0.0, %v821
    %v823 = vpop.f32.mrb[0].mxu0
    %v824 = vadd.f32 0.0, %v823
    %v825 = vpop.f32.mrb[0].mxu0
    %v826 = vadd.f32 0.0, %v825
    %827 = vmatprep.mubr.bf16.mxu0 0
    %828 = vmatmul.mubr.bf16.gmra.mrb[0].mxu0 %v763
    %v829 = vpop.f32.mrb[0].mxu0
    %v830 = vadd.f32 0.0, %v829
    %v831 = vpop.f32.mrb[0].mxu0
    %v832 = vadd.f32 0.0, %v831
    %v833 = vpop.f32.mrb[0].mxu0
    %v834 = vpop.f32.mrb[0].mxu0
    %835 = vdwg.mxu0
    %836 = vmatprep.subr.bf16.mxu0 0
    %837 = vmatpush1.bf16.msra.mxu0 %v718
    %838 = vmatprep.subr.bf16.mxu0 0
    %839 = vmatpush1.bf16.msra.mxu0 %v721
    %840 = vmatprep.subr.bf16.mxu0 0
    %841 = vmatpush1.bf16.msra.mxu0 %v724
    %842 = vmatprep.subr.bf16.mxu0 0
    %843 = vmatpush1.bf16.msra.mxu0 %v727
    %844 = vmatprep.subr.bf16.mxu0 0
    %845 = vmatpush1.bf16.msra.mxu0 %v730
    %846 = vmatprep.subr.bf16.mxu0 0
    %847 = vmatpush1.bf16.msra.mxu0 %v733
    %848 = vmatprep.subr.bf16.mxu0 0
    %849 = vmatpush1.bf16.msra.mxu0 %v773
    %850 = vmatprep.subr.bf16.mxu0 0
    %851 = vmatpush1.bf16.msra.mxu0 0
    %852 = vmatprep.subr.bf16.mxu0 0
    %853 = vmatpush1.bf16.msra.mxu0 0
    %854 = vmatprep.subr.bf16.mxu0 0
    %855 = vmatpush1.bf16.msra.mxu0 0
    %856 = vmatprep.subr.bf16.mxu0 0
    %857 = vmatpush1.bf16.msra.mxu0 0
    %858 = vmatprep.subr.bf16.mxu0 0
    %859 = vmatpush1.bf16.msra.mxu0 0
    %860 = vmatprep.subr.bf16.mxu0 0
    %861 = vmatpush1.bf16.msra.mxu0 0
    %862 = vmatprep.subr.bf16.mxu0 0
    %863 = vmatpush1.bf16.msra.mxu0 0
    %864 = vmatprep.subr.bf16.mxu0 0
    %865 = vmatpush1.bf16.msra.mxu0 0
    %866 = vmatprep.subr.bf16.mxu0 0
    %867 = vmatpush1.bf16.msra.mxu0 0
    %868 = vmatprep.mubr.bf16.mxu0 0
    %869 = vmatmul.mubr.bf16.gmra.mrb[0].mxu0 %v757
    %v870 = vpop.f32.mrb[0].mxu0
    %v871 = vadd.f32 0.0, %v870
    %v872 = vpop.f32.mrb[0].mxu0
    %v873 = vpop.f32.mrb[0].mxu0
    %v874 = vadd.f32 0.0, %v873
    %v875 = vpop.f32.mrb[0].mxu0
    %876 = vmatprep.mubr.bf16.mxu0 0
    %877 = vmatmul.mubr.bf16.gmra.mrb[0].mxu0 %v760
    %v878 = vpop.f32.mrb[0].mxu0
    %v879 = vadd.f32 0.0, %v878
    %v880 = vpop.f32.mrb[0].mxu0
    %v881 = vpop.f32.mrb[0].mxu0
    %v882 = vadd.f32 0.0, %v881
    %v883 = vpop.f32.mrb[0].mxu0
    %884 = vmatprep.mubr.bf16.mxu0 0
    %885 = vmatmul.mubr.bf16.gmra.mrb[0].mxu0 %v763
    %v886 = vpop.f32.mrb[0].mxu0
    %v887 = vadd.f32 0.0, %v886
    %v888 = vpop.f32.mrb[0].mxu0
    %v889 = vpop.f32.mrb[0].mxu0
    %v890 = vpop.f32.mrb[0].mxu0
    %891 = vdwg.mxu0
    %v897 = vrot.slane %v812, 2
    %v898 = vrot.slane %v816, 2
    %v899 = vsel %vm536, %v897, %v898
    %v900 = vrot.slane %v822, 2
    %v901 = vsel %vm536, %v898, %v900
    %v902 = vrot.slane %v826, 2
    %v903 = vsel %vm536, %v900, %v902
    %v904 = vrot.slane %v832, 2
    %v905 = vsel %vm536, %v902, %v904
    %v911 = vadd.f32 %v810, %v899
    %v912 = vadd.f32 %v814, %v901
    %v913 = vadd.f32 %v820, %v903
    %v914 = vadd.f32 %v824, %v905
    %v915 = vadd.f32 %v830, %v904
    %vm921 = vcmask 1043456
    %v922 = vrot.slane %v871, 4
    %v923 = vrot.slane %v874, 4
    %v924 = vsel %vm921, %v922, %v923
    %v925 = vrot.slane %v879, 4
    %v926 = vsel %vm921, %v923, %v925
    %v927 = vrot.slane %v882, 4
    %v928 = vsel %vm921, %v925, %v927
    %v929 = vrot.slane %v887, 4
    %v930 = vsel %vm921, %v927, %v929
    %v936 = vadd.f32 %v911, %v924
    %v937 = vadd.f32 %v912, %v926
    %v938 = vadd.f32 %v913, %v928
    %v939 = vadd.f32 %v914, %v930
    %v940 = vadd.f32 %v915, %v929
    %v941 = vld [vmem:[%s4] sm:$0x1]
    %v943 = vlaneseq
    %v944 = vshrl.u32 %v943, 7
    %v945 = vsub.s32 0, %v944
    %v946 = vrot.slane %v941, %v945
    %v948 = vadd.f32 %v936, %v946
    %v949 = vadd.f32 %v937, %v946
    %v950 = vadd.f32 %v938, %v946
    %v951 = vadd.f32 %v939, %v946
    %v952 = vadd.f32 %v940, %v946
    %v953 = vmax.f32 %v948, 0.0
    %v954 = vmax.f32 %v949, 0.0
    %v955 = vmax.f32 %v950, 0.0
    %v956 = vmax.f32 %v951, 0.0
    %v957 = vmax.f32 %v952, 0.0
    %963 = vrot.lane.b32.xlu0 %v953, 112
    %v964 = vpop.permute.xlu0 %963
    %965 = vrot.lane.b32.xlu0 %v954, 112
    %v966 = vpop.permute.xlu0 %965
    %967 = vrot.lane.b32.xlu0 %v955, 112
    %v968 = vpop.permute.xlu0 %967
    %969 = vrot.lane.b32.xlu0 %v956, 112
    %v970 = vpop.permute.xlu0 %969
    %971 = vrot.lane.b32.xlu0 %v957, 112
    %v972 = vpop.permute.xlu0 %971
    %v978 = vmax.f32 %v953, %v964
    %v979 = vmax.f32 %v954, %v966
    %v980 = vmax.f32 %v955, %v968
    %v981 = vmax.f32 %v956, %v970
    %v982 = vmax.f32 %v957, %v972
    %v988 = vrot.slane %v978, 2
    %v989 = vrot.slane %v979, 2
    %v990 = vsel %vm536, %v988, %v989
    %v991 = vrot.slane %v980, 2
    %v992 = vsel %vm536, %v989, %v991
    %v993 = vrot.slane %v981, 2
    %v994 = vsel %vm536, %v991, %v993
    %v995 = vrot.slane %v982, 2
    %v996 = vsel %vm536, %v993, %v995
    %v1001 = vmax.f32 %v978, %v990
    %v1002 = vmax.f32 %v979, %v992
    %v1003 = vmax.f32 %v980, %v994
    %v1004 = vmax.f32 %v981, %v996
    %v1005 = vpack.c.bf16 %v1002, %v1001
    %v1006 = vpack.c.bf16 %v1004, %v1003
    %v1007 = vld [vmem:[%s5] sm:$0xff]
    %v1008 = vld [vmem:[%s5 + $0x8] sm:$0xf]
    %v1009 = vld [vmem:[%s5 + $0xc] sm:$0xff]
    %v1010 = vld [vmem:[%s5 + $0x14] sm:$0xf]
    %v1011 = vld [vmem:[%s5 + $0x18] sm:$0xff]
    %v1012 = vld [vmem:[%s5 + $0x20] sm:$0xf]
    %v1013 = vld [vmem:[%s5 + $0x24] sm:$0xff]
    %v1014 = vld [vmem:[%s5 + $0x2c] sm:$0xf]
    %v1015 = vld [vmem:[%s5 + $0x30] sm:$0xff]
    %v1016 = vld [vmem:[%s5 + $0x38] sm:$0xf]
    %v1017 = vld [vmem:[%s5 + $0x3c] sm:$0xff]
    %v1018 = vld [vmem:[%s5 + $0x44] sm:$0xf]
    %v1019 = vld [vmem:[%s5 + $0x48] sm:$0xff]
    %v1020 = vld [vmem:[%s5 + $0x50] sm:$0xf]
    %v1021 = vld [vmem:[%s5 + $0x54] sm:$0xff]
    %v1022 = vld [vmem:[%s5 + $0x5c] sm:$0xf]
    %v1023 = vld [vmem:[%s5 + $0x60] sm:$0xff]
    %v1024 = vld [vmem:[%s5 + $0x68] sm:$0xf]
    %v1025 = vld [vmem:[%s5 + $0x6c] sm:$0xff]
    %v1026 = vld [vmem:[%s5 + $0x74] sm:$0xf]
    %v1027 = vld [vmem:[%s5 + $0x78] sm:$0xff]
    %v1028 = vld [vmem:[%s5 + $0x80] sm:$0xf]
    %v1029 = vld [vmem:[%s5 + $0x84] sm:$0xff]
    %v1030 = vld [vmem:[%s5 + $0x8c] sm:$0xf]
    %v1055 = vunpack.c.l.b16 %v1007
    %v1056 = vunpack.c.h.b16 %v1007
    %v1057 = vunpack.c.l.b16 %v1008
    %v1058 = vunpack.c.l.b16 %v1009
    %v1059 = vunpack.c.h.b16 %v1009
    %v1060 = vunpack.c.l.b16 %v1010
    %v1061 = vunpack.c.l.b16 %v1011
    %v1062 = vunpack.c.h.b16 %v1011
    %v1063 = vunpack.c.l.b16 %v1012
    %v1064 = vunpack.c.l.b16 %v1013
    %v1065 = vunpack.c.h.b16 %v1013
    %v1066 = vunpack.c.l.b16 %v1014
    %v1067 = vunpack.c.l.b16 %v1015
    %v1068 = vunpack.c.h.b16 %v1015
    %v1069 = vunpack.c.l.b16 %v1016
    %v1070 = vunpack.c.l.b16 %v1017
    %v1071 = vunpack.c.h.b16 %v1017
    %v1072 = vunpack.c.l.b16 %v1018
    %v1073 = vunpack.c.l.b16 %v1019
    %v1074 = vunpack.c.h.b16 %v1019
    %v1075 = vunpack.c.l.b16 %v1020
    %v1076 = vunpack.c.l.b16 %v1021
    %v1077 = vunpack.c.h.b16 %v1021
    %v1078 = vunpack.c.l.b16 %v1022
    %v1079 = vunpack.c.l.b16 %v1023
    %v1080 = vunpack.c.h.b16 %v1023
    %v1081 = vunpack.c.l.b16 %v1024
    %v1082 = vunpack.c.l.b16 %v1025
    %v1083 = vunpack.c.h.b16 %v1025
    %v1084 = vunpack.c.l.b16 %v1026
    %v1085 = vunpack.c.l.b16 %v1027
    %v1086 = vunpack.c.h.b16 %v1027
    %v1087 = vunpack.c.l.b16 %v1028
    %v1088 = vunpack.c.l.b16 %v1029
    %v1089 = vunpack.c.h.b16 %v1029
    %v1090 = vunpack.c.l.b16 %v1030
    %v1091 = vpack.c.b16 %v1058, %v1055
    %v1092 = vpack.c.b16 %v1059, %v1056
    %v1093 = vpack.c.b16 %v1060, %v1057
    %v1094 = vpack.c.b16 %v1064, %v1061
    %v1095 = vpack.c.b16 %v1065, %v1062
    %v1096 = vpack.c.b16 %v1066, %v1063
    %v1097 = vpack.c.b16 %v1070, %v1067
    %v1098 = vpack.c.b16 %v1071, %v1068
    %v1099 = vpack.c.b16 %v1072, %v1069
    %v1100 = vpack.c.b16 %v1076, %v1073
    %v1101 = vpack.c.b16 %v1077, %v1074
    %v1102 = vpack.c.b16 %v1078, %v1075
    %v1103 = vpack.c.b16 %v1082, %v1079
    %v1104 = vpack.c.b16 %v1083, %v1080
    %v1105 = vpack.c.b16 %v1084, %v1081
    %v1106 = vpack.c.b16 %v1088, %v1085
    %v1107 = vpack.c.b16 %v1089, %v1086
    %v1108 = vpack.c.b16 %v1090, %v1087
    %vm1127 = vcmask 785408
    %v1129 = vsel %vm1127, %v1005, 0
    %v1132 = vsel %vm1127, %v1006, 0
    %1134 = vmatprep.subr.bf16.mxu0 %v1092
    %1135 = vmatpush1.bf16.msra.mxu0 %v1091
    %1136 = vmatprep.subr.bf16.mxu0 %v1095
    %1137 = vmatpush1.bf16.msra.mxu0 %v1094
    %1138 = vmatprep.subr.bf16.mxu0 %v1098
    %1139 = vmatpush1.bf16.msra.mxu0 %v1097
    %1140 = vmatprep.subr.bf16.mxu0 %v1101
    %1141 = vmatpush1.bf16.msra.mxu0 %v1100
    %1142 = vmatprep.subr.bf16.mxu0 %v1104
    %1143 = vmatpush1.bf16.msra.mxu0 %v1103
    %1144 = vmatprep.subr.bf16.mxu0 %v1107
    %1145 = vmatpush1.bf16.msra.mxu0 %v1106
    %1146 = vmatprep.subr.bf16.mxu0 0
    %1147 = vmatpush1.bf16.msra.mxu0 0
    %1148 = vmatprep.subr.bf16.mxu0 0
    %1149 = vmatpush1.bf16.msra.mxu0 0
    %1150 = vmatprep.subr.bf16.mxu0 0
    %1151 = vmatpush1.bf16.msra.mxu0 0
    %1152 = vmatprep.subr.bf16.mxu0 0
    %1153 = vmatpush1.bf16.msra.mxu0 0
    %1154 = vmatprep.subr.bf16.mxu0 0
    %1155 = vmatpush1.bf16.msra.mxu0 0
    %1156 = vmatprep.subr.bf16.mxu0 0
    %1157 = vmatpush1.bf16.msra.mxu0 0
    %1158 = vmatprep.subr.bf16.mxu0 0
    %1159 = vmatpush1.bf16.msra.mxu0 0
    %1160 = vmatprep.subr.bf16.mxu0 0
    %1161 = vmatpush1.bf16.msra.mxu0 0
    %1162 = vmatprep.subr.bf16.mxu0 0
    %1163 = vmatpush1.bf16.msra.mxu0 0
    %1164 = vmatprep.subr.bf16.mxu0 0
    %1165 = vmatpush1.bf16.msra.mxu0 0
    %1166 = vmatprep.mubr.bf16.mxu0 0
    %1167 = vmatmul.mubr.bf16.gmra.mrb[0].mxu0 %v1129
    %v1168 = vpop.f32.mrb[0].mxu0
    %v1169 = vadd.f32 0.0, %v1168
    %v1170 = vpop.f32.mrb[0].mxu0
    %v1171 = vadd.f32 0.0, %v1170
    %v1172 = vpop.f32.mrb[0].mxu0
    %v1173 = vadd.f32 0.0, %v1172
    %v1174 = vpop.f32.mrb[0].mxu0
    %v1175 = vadd.f32 0.0, %v1174
    %1176 = vmatprep.mubr.bf16.mxu0 0
    %1177 = vmatmul.mubr.bf16.gmra.mrb[0].mxu0 %v1132
    %v1178 = vpop.f32.mrb[0].mxu0
    %v1179 = vadd.f32 0.0, %v1178
    %v1180 = vpop.f32.mrb[0].mxu0
    %v1181 = vadd.f32 0.0, %v1180
    %v1182 = vpop.f32.mrb[0].mxu0
    %v1183 = vpop.f32.mrb[0].mxu0
    %v1184 = vadd.f32 0.0, %v1183
    %1185 = vdwg.mxu0
    %1186 = vmatprep.subr.bf16.mxu0 0
    %1187 = vmatpush1.bf16.msra.mxu0 %v1093
    %1188 = vmatprep.subr.bf16.mxu0 0
    %1189 = vmatpush1.bf16.msra.mxu0 %v1096
    %1190 = vmatprep.subr.bf16.mxu0 0
    %1191 = vmatpush1.bf16.msra.mxu0 %v1099
    %1192 = vmatprep.subr.bf16.mxu0 0
    %1193 = vmatpush1.bf16.msra.mxu0 %v1102
    %1194 = vmatprep.subr.bf16.mxu0 0
    %1195 = vmatpush1.bf16.msra.mxu0 %v1105
    %1196 = vmatprep.subr.bf16.mxu0 0
    %1197 = vmatpush1.bf16.msra.mxu0 %v1108
    %1198 = vmatprep.subr.bf16.mxu0 0
    %1199 = vmatpush1.bf16.msra.mxu0 0
    %1200 = vmatprep.subr.bf16.mxu0 0
    %1201 = vmatpush1.bf16.msra.mxu0 0
    %1202 = vmatprep.subr.bf16.mxu0 0
    %1203 = vmatpush1.bf16.msra.mxu0 0
    %1204 = vmatprep.subr.bf16.mxu0 0
    %1205 = vmatpush1.bf16.msra.mxu0 0
    %1206 = vmatprep.subr.bf16.mxu0 0
    %1207 = vmatpush1.bf16.msra.mxu0 0
    %1208 = vmatprep.subr.bf16.mxu0 0
    %1209 = vmatpush1.bf16.msra.mxu0 0
    %1210 = vmatprep.subr.bf16.mxu0 0
    %1211 = vmatpush1.bf16.msra.mxu0 0
    %1212 = vmatprep.subr.bf16.mxu0 0
    %1213 = vmatpush1.bf16.msra.mxu0 0
    %1214 = vmatprep.subr.bf16.mxu0 0
    %1215 = vmatpush1.bf16.msra.mxu0 0
    %1216 = vmatprep.subr.bf16.mxu0 0
    %1217 = vmatpush1.bf16.msra.mxu0 0
    %1218 = vmatprep.mubr.bf16.mxu0 0
    %1219 = vmatmul.mubr.bf16.gmra.mrb[0].mxu0 %v1129
    %v1220 = vpop.f32.mrb[0].mxu0
    %v1221 = vpop.f32.mrb[0].mxu0
    %v1222 = vpop.f32.mrb[0].mxu0
    %v1223 = vadd.f32 0.0, %v1222
    %v1224 = vpop.f32.mrb[0].mxu0
    %1225 = vmatprep.mubr.bf16.mxu0 0
    %1226 = vmatmul.mubr.bf16.gmra.mrb[0].mxu0 %v1132
    %v1227 = vpop.f32.mrb[0].mxu0
    %v1228 = vadd.f32 0.0, %v1227
    %v1229 = vpop.f32.mrb[0].mxu0
    %v1230 = vpop.f32.mrb[0].mxu0
    %v1231 = vadd.f32 0.0, %v1230
    %v1232 = vpop.f32.mrb[0].mxu0
    %1233 = vdwg.mxu0
    %v1238 = vrot.slane %v1171, 4
    %v1239 = vrot.slane %v1175, 4
    %v1240 = vsel %vm921, %v1238, %v1239
    %v1241 = vrot.slane %v1181, 4
    %v1242 = vsel %vm921, %v1239, %v1241
    %v1243 = vrot.slane %v1184, 4
    %v1244 = vsel %vm921, %v1241, %v1243
    %v1248 = vadd.f32 %v1169, %v1240
    %v1249 = vadd.f32 %v1173, %v1242
    %v1250 = vadd.f32 %v1179, %v1244
    %v1251 = vadd.f32 %v1248, %v1223
    %v1252 = vadd.f32 %v1249, %v1228
    %v1253 = vadd.f32 %v1250, %v1231
    %v1254 = vld [vmem:[%s6] sm:$0x1]
    %v1256 = vlaneseq
    %v1257 = vshrl.u32 %v1256, 7
    %v1258 = vsub.s32 0, %v1257
    %v1259 = vrot.slane %v1254, %v1258
    %v1261 = vadd.f32 %v1251, %v1259
    %v1262 = vadd.f32 %v1252, %v1259
    %v1263 = vadd.f32 %v1253, %v1259
    %v1264 = vmax.f32 %v1261, 0.0
    %v1265 = vmax.f32 %v1262, 0.0
    %v1266 = vmax.f32 %v1263, 0.0
    %v1267 = vpack.c.bf16 %v1265, %v1264
    %v1268 = vpack.c.bf16 %v1266, %v1266
    %v1269 = vld [vmem:[%s7] sm:$0x1]
    %vm1270 = vcmask 187392
    %v1272 = vsel %vm1270, %v1269, 0
    %v1274 = vsel %vm765, 4294967295, 65535
    %v1275 = vsel %vm921, %v1274, 0
    %v1277 = vand.u32 %v1268, %v1275
    %1279 = vmatprep.subr.bf16.mxu0 0
    %1280 = vmatpush1.bf16.msra.mxu0 %v1267
    %1281 = vmatprep.subr.bf16.mxu0 0
    %1282 = vmatpush1.bf16.msra.mxu0 %v1277
    %1283 = vmatprep.subr.bf16.mxu0 0
    %1284 = vmatpush1.bf16.msra.mxu0 0
    %1285 = vmatprep.subr.bf16.mxu0 0
    %1286 = vmatpush1.bf16.msra.mxu0 0
    %1287 = vmatprep.subr.bf16.mxu0 0
    %1288 = vmatpush1.bf16.msra.mxu0 0
    %1289 = vmatprep.subr.bf16.mxu0 0
    %1290 = vmatpush1.bf16.msra.mxu0 0
    %1291 = vmatprep.subr.bf16.mxu0 0
    %1292 = vmatpush1.bf16.msra.mxu0 0
    %1293 = vmatprep.subr.bf16.mxu0 0
    %1294 = vmatpush1.bf16.msra.mxu0 0
    %1295 = vmatprep.subr.bf16.mxu0 0
    %1296 = vmatpush1.bf16.msra.mxu0 0
    %1297 = vmatprep.subr.bf16.mxu0 0
    %1298 = vmatpush1.bf16.msra.mxu0 0
    %1299 = vmatprep.subr.bf16.mxu0 0
    %1300 = vmatpush1.bf16.msra.mxu0 0
    %1301 = vmatprep.subr.bf16.mxu0 0
    %1302 = vmatpush1.bf16.msra.mxu0 0
    %1303 = vmatprep.subr.bf16.mxu0 0
    %1304 = vmatpush1.bf16.msra.mxu0 0
    %1305 = vmatprep.subr.bf16.mxu0 0
    %1306 = vmatpush1.bf16.msra.mxu0 0
    %1307 = vmatprep.subr.bf16.mxu0 0
    %1308 = vmatpush1.bf16.msra.mxu0 0
    %1309 = vmatprep.subr.bf16.mxu0 0
    %1310 = vmatpush1.bf16.msra.mxu0 0
    %1311 = vmatprep.mubr.bf16.mxu0 0
    %1312 = vmatmul.mubr.bf16.gmra.mrb[0].mxu0 %v1272
    %v1313 = vpop.f32.mrb[0].mxu0
    %v1314 = vadd.f32 0.0, %v1313
    %v1315 = vpop.f32.mrb[0].mxu0
    %v1316 = vpop.f32.mrb[0].mxu0
    %v1317 = vpop.f32.mrb[0].mxu0
    %1318 = vdwg.mxu0
    %v1319 = vpack.c.bf16 %v1314, %v1314
    %v1320 = vld [vmem:[%s8] sm:$0xf]
    %v1321 = vld [vmem:[%s8 + $0x4] sm:$0xf]
    %v1322 = vld [vmem:[%s8 + $0x8] sm:$0xf]
    %v1323 = vld [vmem:[%s8 + $0xc] sm:$0xf]
    %v1324 = vld [vmem:[%s8 + $0x10] sm:$0xf]
    %v1325 = vld [vmem:[%s8 + $0x14] sm:$0xf]
    %v1326 = vld [vmem:[%s8 + $0x18] sm:$0xf]
    %v1327 = vld [vmem:[%s8 + $0x1c] sm:$0xf]
    %v1328 = vld [vmem:[%s8 + $0x20] sm:$0xf]
    %v1329 = vld [vmem:[%s8 + $0x24] sm:$0xf]
    %v1330 = vld [vmem:[%s8 + $0x28] sm:$0xf]
    %v1331 = vld [vmem:[%s8 + $0x2c] sm:$0xf]
    %v1332 = vld [vmem:[%s8 + $0x30] sm:$0xf]
    %v1333 = vld [vmem:[%s8 + $0x34] sm:$0xf]
    %v1334 = vld [vmem:[%s8 + $0x38] sm:$0xf]
    %v1335 = vld [vmem:[%s9] sm:$0x1]
    %v1337 = vlaneseq
    %v1338 = vshrl.u32 %v1337, 7
    %v1339 = vsub.s32 0, %v1338
    %v1340 = vrot.slane %v1335, %v1339
    %v1357 = vunpack.c.l.b16 %v1320
    %v1358 = vunpack.c.l.b16 %v1321
    %v1359 = vunpack.c.l.b16 %v1322
    %v1360 = vunpack.c.l.b16 %v1323
    %v1361 = vunpack.c.l.b16 %v1324
    %v1362 = vunpack.c.l.b16 %v1325
    %v1363 = vunpack.c.l.b16 %v1326
    %v1364 = vunpack.c.l.b16 %v1327
    %v1365 = vunpack.c.l.b16 %v1328
    %v1366 = vunpack.c.l.b16 %v1329
    %v1367 = vunpack.c.l.b16 %v1330
    %v1368 = vunpack.c.l.b16 %v1331
    %v1369 = vunpack.c.l.b16 %v1332
    %v1370 = vunpack.c.l.b16 %v1333
    %v1371 = vunpack.c.l.b16 %v1334
    %v1372 = vpack.c.b16 %v1358, %v1357
    %v1373 = vpack.c.b16 %v1360, %v1359
    %v1374 = vpack.c.b16 %v1362, %v1361
    %v1375 = vpack.c.b16 %v1364, %v1363
    %v1376 = vpack.c.b16 %v1366, %v1365
    %v1377 = vpack.c.b16 %v1368, %v1367
    %v1378 = vpack.c.b16 %v1370, %v1369
    %v1379 = vpack.c.b16 %v1371, %v1371
    %vm1387 = vcmask 982016
    %v1389 = vsel %vm1387, %v1319, 0
    %v1392 = vsel %vm921, %v1379, 0
    %1394 = vmatprep.subr.bf16.mxu0 0
    %1395 = vmatpush1.bf16.msra.mxu0 %v1372
    %1396 = vmatprep.subr.bf16.mxu0 0
    %1397 = vmatpush1.bf16.msra.mxu0 %v1373
    %1398 = vmatprep.subr.bf16.mxu0 0
    %1399 = vmatpush1.bf16.msra.mxu0 %v1374
    %1400 = vmatprep.subr.bf16.mxu0 0
    %1401 = vmatpush1.bf16.msra.mxu0 %v1375
    %1402 = vmatprep.subr.bf16.mxu0 0
    %1403 = vmatpush1.bf16.msra.mxu0 %v1376
    %1404 = vmatprep.subr.bf16.mxu0 0
    %1405 = vmatpush1.bf16.msra.mxu0 %v1377
    %1406 = vmatprep.subr.bf16.mxu0 0
    %1407 = vmatpush1.bf16.msra.mxu0 %v1378
    %1408 = vmatprep.subr.bf16.mxu0 0
    %1409 = vmatpush1.bf16.msra.mxu0 %v1392
    %1410 = vmatprep.subr.bf16.mxu0 0
    %1411 = vmatpush1.bf16.msra.mxu0 0
    %1412 = vmatprep.subr.bf16.mxu0 0
    %1413 = vmatpush1.bf16.msra.mxu0 0
    %1414 = vmatprep.subr.bf16.mxu0 0
    %1415 = vmatpush1.bf16.msra.mxu0 0
    %1416 = vmatprep.subr.bf16.mxu0 0
    %1417 = vmatpush1.bf16.msra.mxu0 0
    %1418 = vmatprep.subr.bf16.mxu0 0
    %1419 = vmatpush1.bf16.msra.mxu0 0
    %1420 = vmatprep.subr.bf16.mxu0 0
    %1421 = vmatpush1.bf16.msra.mxu0 0
    %1422 = vmatprep.subr.bf16.mxu0 0
    %1423 = vmatpush1.bf16.msra.mxu0 0
    %1424 = vmatprep.subr.bf16.mxu0 0
    %1425 = vmatpush1.bf16.msra.mxu0 0
    %1426 = vmatprep.mubr.bf16.mxu0 0
    %1427 = vmatmul.mubr.bf16.gmra.mrb[0].mxu0 %v1389
    %v1428 = vpop.f32.mrb[0].mxu0
    %v1429 = vadd.f32 %v1340, %v1428
    %v1430 = vpop.f32.mrb[0].mxu0
    %v1431 = vpop.f32.mrb[0].mxu0
    %v1432 = vpop.f32.mrb[0].mxu0
    %1433 = vdwg.mxu0
    %v1434 = vmax.f32 %v1429, 0.0
    %1435 = vst [vmem:[#allocation2] sm:$0x3] %v1434
    // Predicated region
    $region42: #{_lambda_.1} parent=1 // pred_check
      _
    $region43: #{_lambda_.1} parent=1 // pred_check_branch
      %1437 = sbr.rel (0) target = $region45
    $region44: #{_lambda_.1} parent=1 // pred_region
      %s1439 = ssub.s32 32, 32
      %1440 = vsyncadd [#allocation3], %s1439
      %s1442 = sshll.u32 [#allocation2], 4
      %s1443 = int_to_ptr.vmem [resolvable:$true] %s1442
      %1445 = dma.vmem_to_hbm [thread:$0]  %s1443, 32, %s10, [#allocation3]
    $region45: #{_lambda_.1} parent=1 // pred_fallthru
      _
    // Predicated region
    $region46: #{_lambda_.1} parent=1 // pred_check
      _
    $region47: #{_lambda_.1} parent=1 // pred_check_branch
      %1447 = sbr.rel (0) target = $region49
    $region48: #{_lambda_.1} parent=1 // pred_region
      %1448 = dma.done [#allocation3], 32
    $region49: #{_lambda_.1} parent=1 // pred_fallthru
      _
    %1449 = vsyncpa [#allocation3], 1

</llo_original>
